<compile_context>
chip_gen: v7x
topology: tpu7x:2x2x1
jax: 0.10.0
libtpu: 0.0.40
codegen_flags: <defaults>
</compile_context>

<pallas_src>
import functools

import jax
import jax.numpy as jnp
from jax.experimental import pallas as pl
from jax.experimental.pallas import tpu as pltpu


def prenorm_kernel(x_ref, g_ref, w_ref, b_ref, o_ref, *, eps):
    # x_ref: (1, C, T) input block (channels on sublanes, spatial tile on lanes)
    # g_ref: (C, 1)  LayerNorm gain (f32)
    # w_ref: (C, C)  pointwise-conv weight, bf16, used as y = w @ xn
    # b_ref: (C, 1)  pointwise-conv bias (f32)
    x = x_ref[0].astype(jnp.float32)                       # (C, T)

    # Channel LayerNorm; statistics stay in f32 (important on v5e: no bf16 VPU/EUP).
    # Single pass: var = E[x^2] - mean^2, clamped against cancellation.
    mean = jnp.mean(x, axis=0, keepdims=True)              # (1, T)
    var = jnp.mean(x * x, axis=0, keepdims=True) - mean * mean
    var = jnp.maximum(var, 0.0)
    xn = (x - mean) * jax.lax.rsqrt(var + eps) * g_ref[...].astype(jnp.float32)

    # fn: 1x1 conv over channels == channel matmul on the MXU (bf16 in, f32 acc).
    y = jnp.dot(w_ref[...], xn.astype(jnp.bfloat16),
                preferred_element_type=jnp.float32)        # (C, T)
    o_ref[0] = (y + b_ref[...].astype(jnp.float32)).astype(o_ref.dtype)


def _pick_spatial_tile(C, HW, budget_bytes):
    """Largest lane-dense spatial tile whose double-buffered blocks fit the budget."""
    # in + out blocks, f32, double-buffered: 2 * 2 * (C * T * 4) = 16*C*T bytes.
    # Constant operands: bf16 weight (double-buffered) + tiny g/b.
    const_bytes = 4 * C * C + 32 * C + 4096
    avail = max(budget_bytes - const_bytes, 16 * C * 128)
    t = min(HW, avail // (16 * C))
    if t < HW:
        # Multiple of 128 -> unmasked, lane-dense vector stores.
        t = max(128, (t // 128) * 128)
    return int(t)


def prenorm_pallas(x_nchw, g, w_conv, b_conv, *,
                   vmem_block_budget_bytes=24 * 1024 * 1024):
    """PreNorm forward: fn(LayerNorm(x)) with fn = 1x1 conv.

    x_nchw: (N, C, H, W). g: (C,) LayerNorm gain. w_conv: (C, C) 1x1-conv weight
    (out, in). b_conv: (C,) bias. Returns (N, C, H, W) in x's dtype.
    """
    N, C, H, W = x_nchw.shape
    HW = H * W
    eps = 1e-5 if x_nchw.dtype == jnp.float32 else 1e-3    # matches the PyTorch module

    x3d = x_nchw.reshape(N, C, HW)                 # contiguous reshape: no HBM transpose
    g2d = g.reshape(C, 1).astype(jnp.float32)
    b2d = b_conv.reshape(C, 1).astype(jnp.float32)
    w_bf = w_conv.astype(jnp.bfloat16)             # halves weight DMA, feeds MXU bf16

    T = _pick_spatial_tile(C, HW, vmem_block_budget_bytes)
    # Ragged tail tiles are fine: there is no reduction along the spatial axis,
    # so partial edge blocks only touch their own (discarded) columns.
    grid = (N, pl.cdiv(HW, T))

    out3d = pl.pallas_call(
        functools.partial(prenorm_kernel, eps=eps),
        out_shape=jax.ShapeDtypeStruct((N, C, HW), x_nchw.dtype),
        grid_spec=pltpu.PrefetchScalarGridSpec(
            num_scalar_prefetch=0,
            grid=grid,
            in_specs=[
                pl.BlockSpec((1, C, T), lambda n, t: (n, 0, t)),
                pl.BlockSpec((C, 1), lambda n, t: (0, 0)),   # constant index:
                pl.BlockSpec((C, C), lambda n, t: (0, 0)),   #   fetched once, not per step
                pl.BlockSpec((C, 1), lambda n, t: (0, 0)),
            ],
            out_specs=pl.BlockSpec((1, C, T), lambda n, t: (n, 0, t)),
        ),
        compiler_params=pltpu.CompilerParams(
            # No reduction grid axis -> both dims parallel (v7x: shards across 2 TCs;
            # no-op on v5e/v6e).
            dimension_semantics=("parallel", "parallel"),
            # Raise scoped VMEM above the 16/32 MiB defaults but stay under v7x's
            # 64 MiB physical VMEM; the ~24 MiB block budget leaves compiler headroom.
            vmem_limit_bytes=48 * 1024 * 1024,
        ),
    )(x3d, g2d, w_bf, b2d)

    return out3d.reshape(N, C, H, W)


def prenorm_reference(x_nchw, g, w_conv, b_conv):
    """Pure-JAX reference matching the PyTorch module semantics (f32 math)."""
    eps = 1e-5 if x_nchw.dtype == jnp.float32 else 1e-3
    mean = jnp.mean(x_nchw, axis=1, keepdims=True)
    var = jnp.mean((x_nchw - mean) ** 2, axis=1, keepdims=True)
    xn = (x_nchw - mean) * jax.lax.rsqrt(var + eps) * g.reshape(1, -1, 1, 1)
    # 1x1 conv: out[n, o, h, w] = sum_c w[o, c] * xn[n, c, h, w] + b[o]
    y = jnp.einsum("oc,nchw->nohw", w_conv, xn) + b_conv.reshape(1, -1, 1, 1)
    return y


if __name__ == "__main__":
    key = jax.random.PRNGKey(0)
    k_x, k_w, k_b = jax.random.split(key, 3)

    N, C, H, W = 2, 4, 16, 16
    x = jax.random.normal(k_x, (N, C, H, W), dtype=jnp.float32)

    # Parameters (deterministic init):
    g = jnp.ones((C,), dtype=jnp.float32)                              # LayerNorm.g
    w_conv = jax.random.normal(k_w, (C, C), dtype=jnp.float32) * 0.1   # fn: Conv2d(C, C, 1) weight
    b_conv = jax.random.normal(k_b, (C,), dtype=jnp.float32) * 0.1     # fn: Conv2d bias

    out = prenorm_pallas(x, g, w_conv, b_conv)
    out = jax.block_until_ready(out)

    ref = prenorm_reference(x, g, w_conv, b_conv)
    assert out.shape == (N, C, H, W)
    # bf16 MXU inputs -> loosened tolerance (stats/accumulate are still f32).
    assert jnp.allclose(out, ref, atol=1e-2, rtol=1e-2), "mismatch vs reference"

    print("KERNEL_OK")
</pallas_src>

<mosaic_0001>
module attributes {stable_mosaic.version = 11 : i64} {
  func.func @prenorm_kernel(%arg0: i32, %arg1: i32, %arg2: memref<1x4x256xf32, #tpu.memory_space<vmem>>, %arg3: memref<4x1xf32, #tpu.memory_space<vmem>>, %arg4: memref<4x4xbf16, #tpu.memory_space<vmem>>, %arg5: memref<4x1xf32, #tpu.memory_space<vmem>>, %arg6: memref<1x4x256xf32, #tpu.memory_space<vmem>>) attributes {dimension_semantics = [#tpu.dimension_semantics<parallel>, #tpu.dimension_semantics<parallel>], iteration_bounds = array<i64: 2, 1>, scalar_prefetch = 0 : i64, scratch_operands = 0 : i64, tpu.core_type = #tpu.core_type<tc>, window_params = [{transform_indices = @transform_0, window_bounds = array<i64: 1, 4, 256>}, {pipeline_mode = #tpu.pipeline_mode<synchronous>, transform_indices = @transform_1, window_bounds = array<i64: 4, 1>}, {pipeline_mode = #tpu.pipeline_mode<synchronous>, transform_indices = @transform_2, window_bounds = array<i64: 4, 4>}, {pipeline_mode = #tpu.pipeline_mode<synchronous>, transform_indices = @transform_3, window_bounds = array<i64: 4, 1>}, {transform_indices = @transform_4, window_bounds = array<i64: 1, 4, 256>}]} {
    %c0 = arith.constant 0 : index
    %c0_0 = arith.constant 0 : index
    %c0_1 = arith.constant 0 : index
    %0 = vector.load %arg2[%c0, %c0_0, %c0_1] : memref<1x4x256xf32, #tpu.memory_space<vmem>>, vector<1x4x256xf32>
    %1 = vector.shape_cast %0 : vector<1x4x256xf32> to vector<4x256xf32>
    %cst = arith.constant dense<0.000000e+00> : vector<256xf32>
    %2 = vector.multi_reduction <add>, %1, %cst [0] : vector<4x256xf32> to vector<256xf32>
    %3 = vector.shape_cast %2 : vector<256xf32> to vector<1x256xf32>
    %cst_2 = arith.constant 4.000000e+00 : f32
    %4 = vector.broadcast %cst_2 : f32 to vector<1x256xf32>
    %5 = arith.divf %3, %4 : vector<1x256xf32>
    %6 = arith.mulf %1, %1 : vector<4x256xf32>
    %cst_3 = arith.constant dense<0.000000e+00> : vector<256xf32>
    %7 = vector.multi_reduction <add>, %6, %cst_3 [0] : vector<4x256xf32> to vector<256xf32>
    %8 = vector.shape_cast %7 : vector<256xf32> to vector<1x256xf32>
    %cst_4 = arith.constant 4.000000e+00 : f32
    %9 = vector.broadcast %cst_4 : f32 to vector<1x256xf32>
    %10 = arith.divf %8, %9 : vector<1x256xf32>
    %11 = arith.mulf %5, %5 : vector<1x256xf32>
    %12 = arith.subf %10, %11 : vector<1x256xf32>
    %cst_5 = arith.constant 0.000000e+00 : f32
    %13 = vector.broadcast %cst_5 : f32 to vector<1x256xf32>
    %14 = arith.maximumf %12, %13 : vector<1x256xf32>
    %15 = vector.broadcast %5 : vector<1x256xf32> to vector<4x256xf32>
    %16 = arith.subf %1, %15 : vector<4x256xf32>
    %cst_6 = arith.constant 9.99999974E-6 : f32
    %17 = vector.broadcast %cst_6 : f32 to vector<1x256xf32>
    %18 = arith.addf %14, %17 : vector<1x256xf32>
    %19 = math.rsqrt %18 : vector<1x256xf32>
    %20 = vector.broadcast %19 : vector<1x256xf32> to vector<4x256xf32>
    %21 = arith.mulf %16, %20 : vector<4x256xf32>
    %c0_7 = arith.constant 0 : index
    %c0_8 = arith.constant 0 : index
    %22 = vector.load %arg3[%c0_7, %c0_8] : memref<4x1xf32, #tpu.memory_space<vmem>>, vector<4x1xf32>
    %23 = vector.broadcast %22 : vector<4x1xf32> to vector<4x256xf32>
    %24 = arith.mulf %21, %23 : vector<4x256xf32>
    %c0_9 = arith.constant 0 : index
    %c0_10 = arith.constant 0 : index
    %25 = vector.load %arg4[%c0_9, %c0_10] : memref<4x4xbf16, #tpu.memory_space<vmem>>, vector<4x4xbf16>
    %26 = arith.truncf %24 : vector<4x256xf32> to vector<4x256xbf16>
    %cst_11 = arith.constant dense<0.000000e+00> : vector<4x256xf32>
    %27 = tpu.matmul %25, %26, %cst_11 {dimension_numbers = #tpu.dot_dimension_numbers<[1], [0], [0], [1], [0, 0, 1, 1], [], []>} : vector<4x4xbf16>, vector<4x256xbf16>, vector<4x256xf32> -> vector<4x256xf32>
    %c0_12 = arith.constant 0 : index
    %c0_13 = arith.constant 0 : index
    %28 = vector.load %arg5[%c0_12, %c0_13] : memref<4x1xf32, #tpu.memory_space<vmem>>, vector<4x1xf32>
    %29 = vector.broadcast %28 : vector<4x1xf32> to vector<4x256xf32>
    %30 = arith.addf %27, %29 : vector<4x256xf32>
    %c0_14 = arith.constant 0 : index
    %c0_15 = arith.constant 0 : index
    %c0_16 = arith.constant 0 : index
    %31 = vector.load %arg6[%c0_14, %c0_15, %c0_16] : memref<1x4x256xf32, #tpu.memory_space<vmem>>, vector<1x4x256xf32>
    %32 = vector.shape_cast %31 : vector<1x4x256xf32> to vector<4x256xf32>
    %33 = vector.shape_cast %30 : vector<4x256xf32> to vector<1x4x256xf32>
    tpu.vector_store %arg6[%c0_14, %c0_15, %c0_16], %33 {strides = array<i32>} : memref<1x4x256xf32, #tpu.memory_space<vmem>>, vector<1x4x256xf32>,
    return
  }
  func.func @transform_0(%arg0: i32, %arg1: i32) -> (i32, i32, i32) {
    %c0_i32 = arith.constant 0 : i32
    %c0_i32_0 = arith.constant 0 : i32
    return %arg0, %c0_i32, %arg1 : i32, i32, i32
  }
  func.func @transform_1(%arg0: i32, %arg1: i32) -> (i32, i32) {
    %c0_i32 = arith.constant 0 : i32
    %c0_i32_0 = arith.constant 0 : i32
    %c0_i32_1 = arith.constant 0 : i32
    return %c0_i32, %c0_i32_0 : i32, i32
  }
  func.func @transform_2(%arg0: i32, %arg1: i32) -> (i32, i32) {
    %c0_i32 = arith.constant 0 : i32
    %c0_i32_0 = arith.constant 0 : i32
    %c0_i32_1 = arith.constant 0 : i32
    return %c0_i32, %c0_i32_0 : i32, i32
  }
  func.func @transform_3(%arg0: i32, %arg1: i32) -> (i32, i32) {
    %c0_i32 = arith.constant 0 : i32
    %c0_i32_0 = arith.constant 0 : i32
    %c0_i32_1 = arith.constant 0 : i32
    return %c0_i32, %c0_i32_0 : i32, i32
  }
  func.func @transform_4(%arg0: i32, %arg1: i32) -> (i32, i32, i32) {
    %c0_i32 = arith.constant 0 : i32
    %c0_i32_0 = arith.constant 0 : i32
    return %arg0, %c0_i32, %arg1 : i32, i32, i32
  }
}

</mosaic_0001>

<llo_original>
// kernel: tpu_custom_call.1
$region0: #{tpu_custom_call.1}
  #allocation0 [shape = 'u32[]', space=smem, size = 0x4, offset = 0x4, fixed_abs, tag = 'smem constant byte address 0x4 - core index']
  #allocation1 [shape = 'u32[144,128]{1,0:T(1,128)}', space=vmem, size = 0x12000, scoped, tag = 'internal scratch']
  %s0 = inlined_call_operand.hbm [shape: f32[2,4,256], index: 0, kind: input, shape index: {}]
  %s1 = inlined_call_operand.vmem [shape: f32[4,1], index: 1, kind: input, shape index: {}]
  %s2 = inlined_call_operand.vmem [shape: bf16[4,4], index: 2, kind: input, shape index: {}]
  %s3 = inlined_call_operand.vmem [shape: f32[4,1], index: 3, kind: input, shape index: {}]
  %s4 = inlined_call_operand.hbm [shape: f32[2,4,256], index: 4, kind: output, shape index: {}]
  %s5 = sld [smem:[#allocation0]]
  $region53: #{tpu_custom_call.1} parent=0
    _
  %s7 = ssub.s32 1, %s5
  %s8 = scalar_select 0, %s7, %s5
  $region1: #{tpu_custom_call.1} parent=0
    #allocation2 [shape = 'u8[8192]{0}', space=vmem, size = 0x2000, scoped, tag = 'input window, operand 0']
    #allocation3 [shape = 's32[2]{0}', space=sflag, size = 0x8, scoped, tag = 'scoped memory for tpu_custom_call.1']
    #allocation4 [shape = 's32[2]{0}', space=sflag, size = 0x8, scoped, tag = 'scoped memory for tpu_custom_call.1']
    #allocation5 [shape = 'u8[8192]{0}', space=vmem, size = 0x2000, scoped, tag = 'output window, operand 0']
    %9 = vsyncpa [#allocation3], 0
    %s10 = scalar_lea.sflag [#allocation3], 1
    %11 = vsyncpa %s10, 0
    %12 = vsyncpa [#allocation4], 0
    %s13 = scalar_lea.sflag [#allocation4], 1
    %14 = vsyncpa %s13, 0
    loop: start=0, step=1, limit=4
    $region2: #{tpu_custom_call.1} parent=1 // loop_pre_header
      _
    $region3: #{tpu_custom_call.1} parent=1 // loop_header
      %s16 = sphi 0, %s20
      %p17 = scmp.ge.s32.totalorder %s16, 4
      %s23 = sphi 0, %s35
      %s24 = sphi 0, %s31
      %s25 = sphi 0, %s23
      %s26 = sphi 0, %s24
      %s27 = sphi 0, %s25
      %s28 = sphi 0, %s26
      %s40 = sphi 0, %s42
      %s43 = sphi 0, %s40
      %s44 = sphi 0, %s43
      %s60 = sphi 0, %s44
      %s64 = sphi 0, %s64
      %s66 = sphi 0, %s64
      %s67 = sphi 0, %s66
      %s81 = sphi 0, %s67
      %s85 = sphi 0, %s85
      %s87 = sphi 0, %s85
      %s88 = sphi 0, %s87
      %s102 = sphi 0, %s88
      %s106 = sphi 0, %s106
      %s108 = sphi 0, %s106
      %s109 = sphi 0, %s108
      %s123 = sphi 0, %s109
      %s131 = sphi 0, %s133
      %s134 = sphi 0, %s131
      %s135 = sphi 0, %s134
      %s151 = sphi 0, %s135
    $region4: #{tpu_custom_call.1} parent=1 // loop_header_branch
      %19 = sbr.rel (%p17) target = $region8
    $region5: #{tpu_custom_call.1} parent=1 // loop_body
      %s21 = ssub.s32 %s16, 1
      %s22 = ssub.s32 %s16, 2
      %s29 = sadd.s32 1, %s24
      %p30 = scmp.ge.s32.totalorder %s29, 1
      %s31 = scalar_select %p30, 0, %s29
      %s32 = sadd.s32 1, %s23
      %s33 = scalar_select %p30, %s32, %s23
      %p34 = scmp.ge.s32.totalorder %s33, 2
      %s35 = scalar_select %p34, 0, %s33
      %s36 = ssub.s32 %s23, %s35
      %s37 = ssub.s32 %s24, %s31
      %s38 = sor.u32 %s36, %s37
      %p39 = scmp.eq.s32.totalorder %s38, 0
      %s41 = sadd.s32 %s40, 1
      %s42 = scalar_select %p39, %s40, %s41
      %p45 = pneg %p39
      %p46 = scmp.eq.s32.totalorder %s16, 1
      %p47 = por %p45, %p46
      %p48 = scmp.ne.s32.totalorder %s40, %s43
      %p49 = scmp.eq.s32.totalorder %s16, 0
      %p50 = por %p48, %p49
      %p51 = scmp.ne.s32.totalorder %s40, %s43
      %p52 = scmp.eq.s32.totalorder %s21, 1
      %p53 = por %p51, %p52
      %p54 = scmp.ne.s32.totalorder %s43, %s44
      %p55 = scmp.eq.s32.totalorder %s21, 0
      %p56 = por %p54, %p55
      %p57 = scmp.ne.s32.totalorder %s43, %s44
      %p58 = scmp.eq.s32.totalorder %s22, 1
      %p59 = por %p57, %p58
      %p61 = scmp.ne.s32.totalorder %s44, %s60
      %p62 = scmp.eq.s32.totalorder %s22, 0
      %p63 = por %p61, %p62
      %s65 = sadd.s32 %s64, 1
      %p68 = scmp.eq.s32.totalorder %s16, 1
      %p69 = scmp.ne.s32.totalorder %s64, %s66
      %p70 = scmp.eq.s32.totalorder %s16, 0
      %p71 = por %p69, %p70
      %p72 = scmp.ne.s32.totalorder %s64, %s66
      %p73 = scmp.eq.s32.totalorder %s21, 1
      %p74 = por %p72, %p73
      %p75 = scmp.ne.s32.totalorder %s66, %s67
      %p76 = scmp.eq.s32.totalorder %s21, 0
      %p77 = por %p75, %p76
      %p78 = scmp.ne.s32.totalorder %s66, %s67
      %p79 = scmp.eq.s32.totalorder %s22, 1
      %p80 = por %p78, %p79
      %p82 = scmp.ne.s32.totalorder %s67, %s81
      %p83 = scmp.eq.s32.totalorder %s22, 0
      %p84 = por %p82, %p83
      %s86 = sadd.s32 %s85, 1
      %p89 = scmp.eq.s32.totalorder %s16, 1
      %p90 = scmp.ne.s32.totalorder %s85, %s87
      %p91 = scmp.eq.s32.totalorder %s16, 0
      %p92 = por %p90, %p91
      %p93 = scmp.ne.s32.totalorder %s85, %s87
      %p94 = scmp.eq.s32.totalorder %s21, 1
      %p95 = por %p93, %p94
      %p96 = scmp.ne.s32.totalorder %s87, %s88
      %p97 = scmp.eq.s32.totalorder %s21, 0
      %p98 = por %p96, %p97
      %p99 = scmp.ne.s32.totalorder %s87, %s88
      %p100 = scmp.eq.s32.totalorder %s22, 1
      %p101 = por %p99, %p100
      %p103 = scmp.ne.s32.totalorder %s88, %s102
      %p104 = scmp.eq.s32.totalorder %s22, 0
      %p105 = por %p103, %p104
      %s107 = sadd.s32 %s106, 1
      %p110 = scmp.eq.s32.totalorder %s16, 1
      %p111 = scmp.ne.s32.totalorder %s106, %s108
      %p112 = scmp.eq.s32.totalorder %s16, 0
      %p113 = por %p111, %p112
      %p114 = scmp.ne.s32.totalorder %s106, %s108
      %p115 = scmp.eq.s32.totalorder %s21, 1
      %p116 = por %p114, %p115
      %p117 = scmp.ne.s32.totalorder %s108, %s109
      %p118 = scmp.eq.s32.totalorder %s21, 0
      %p119 = por %p117, %p118
      %p120 = scmp.ne.s32.totalorder %s108, %s109
      %p121 = scmp.eq.s32.totalorder %s22, 1
      %p122 = por %p120, %p121
      %p124 = scmp.ne.s32.totalorder %s109, %s123
      %p125 = scmp.eq.s32.totalorder %s22, 0
      %p126 = por %p124, %p125
      %s127 = ssub.s32 %s23, %s35
      %s128 = ssub.s32 %s24, %s31
      %s129 = sor.u32 %s127, %s128
      %p130 = scmp.eq.s32.totalorder %s129, 0
      %s132 = sadd.s32 %s131, 1
      %s133 = scalar_select %p130, %s131, %s132
      %p136 = pneg %p130
      %p137 = scmp.eq.s32.totalorder %s16, 1
      %p138 = por %p136, %p137
      %p139 = scmp.ne.s32.totalorder %s131, %s134
      %p140 = scmp.eq.s32.totalorder %s16, 0
      %p141 = por %p139, %p140
      %p142 = scmp.ne.s32.totalorder %s131, %s134
      %p143 = scmp.eq.s32.totalorder %s21, 1
      %p144 = por %p142, %p143
      %p145 = scmp.ne.s32.totalorder %s134, %s135
      %p146 = scmp.eq.s32.totalorder %s21, 0
      %p147 = por %p145, %p146
      %p148 = scmp.ne.s32.totalorder %s134, %s135
      %p149 = scmp.eq.s32.totalorder %s22, 1
      %p150 = por %p148, %p149
      %p152 = scmp.ne.s32.totalorder %s135, %s151
      %p153 = scmp.eq.s32.totalorder %s22, 0
      %p154 = por %p152, %p153
      %p155 = scmp.le.s32.totalorder 1, %s16
      %p156 = scmp.lt.s32.totalorder %s16, 3
      %p157 = pnand %p155, %p156
      %p158 = pneg %p157
      // Predicated region
      $region9: #{tpu_custom_call.1} parent=5 // pred_check
        _
      $region10: #{tpu_custom_call.1} parent=5 // pred_check_branch
        %160 = sbr.rel (%p157) target = $region12
      $region11: #{tpu_custom_call.1} parent=5 // pred_region
        %s161 = ssub.s32 %s16, 1
        // Predicated region
        $region13: #{tpu_custom_call.1} parent=11 // pred_check
          %p162 = pneg %p77
        $region14: #{tpu_custom_call.1} parent=11 // pred_check_branch
          %164 = sbr.rel (%p162) target = $region16
        $region15: #{tpu_custom_call.1} parent=11 // pred_region
          _
        $region16: #{tpu_custom_call.1} parent=11 // pred_fallthru
          _
        // Predicated region
        $region17: #{tpu_custom_call.1} parent=11 // pred_check
          %p165 = pneg %p98
        $region18: #{tpu_custom_call.1} parent=11 // pred_check_branch
          %167 = sbr.rel (%p165) target = $region20
        $region19: #{tpu_custom_call.1} parent=11 // pred_region
          _
        $region20: #{tpu_custom_call.1} parent=11 // pred_fallthru
          _
        // Predicated region
        $region21: #{tpu_custom_call.1} parent=11 // pred_check
          %p168 = pneg %p119
        $region22: #{tpu_custom_call.1} parent=11 // pred_check_branch
          %170 = sbr.rel (%p168) target = $region24
        $region23: #{tpu_custom_call.1} parent=11 // pred_region
          _
        $region24: #{tpu_custom_call.1} parent=11 // pred_fallthru
          _
      $region12: #{tpu_custom_call.1} parent=5 // pred_fallthru
        _
      %p171 = scmp.lt.s32.totalorder %s16, 2
      // Predicated region
      $region25: #{tpu_custom_call.1} parent=5 // pred_check
        %p172 = pneg %p171
      $region26: #{tpu_custom_call.1} parent=5 // pred_check_branch
        %174 = sbr.rel (%p172) target = $region28
      $region27: #{tpu_custom_call.1} parent=5 // pred_region
        // Predicated region
        $region29: #{tpu_custom_call.1} parent=27 // pred_check
          %p175 = pneg %p50
        $region30: #{tpu_custom_call.1} parent=27 // pred_check_branch
          %177 = sbr.rel (%p175) target = $region32
        $region31: #{tpu_custom_call.1} parent=27 // pred_region
          %s178 = sand.u32 %s40, 1
          %s179 = scalar_lea.sflag [#allocation3], %s178
          %s180 = sand.u32 %s40, 1
          %s181 = smul.addr %s180, 8
          %s182 = scalar_lea.vmem [#allocation2], %s181
          %s183 = smul.u32 2, %s24
          %s185 = ssub.s32 128, 128
          %186 = vsyncadd %s179, %s185
          %s187 = smul.addr %s23, 2
          %s188 = sadd.s32 %s183, %s187
          %s189 = smul.addr %s188, 64
          %s190 = scalar_lea.hbm %s0, %s189
          %s192 = sshll.u32 %s182, 4
          %s193 = int_to_ptr.vmem [resolvable:$true] %s192
          %195 = dma.hbm_to_vmem [thread:$0]  %s190, 128, %s193, %s179
        $region32: #{tpu_custom_call.1} parent=27 // pred_fallthru
          _
      $region28: #{tpu_custom_call.1} parent=5 // pred_fallthru
        _
      %p196 = scmp.le.s32.totalorder 1, %s16
      %p197 = scmp.lt.s32.totalorder %s16, 3
      %p198 = pnand %p196, %p197
      %p199 = pneg %p198
      // Predicated region
      $region33: #{tpu_custom_call.1} parent=5 // pred_check
        _
      $region34: #{tpu_custom_call.1} parent=5 // pred_check_branch
        %201 = sbr.rel (%p198) target = $region36
      $region35: #{tpu_custom_call.1} parent=5 // pred_region
        %s202 = ssub.s32 %s16, 1
        %s203 = sand.u32 %s43, 1
        %s204 = scalar_lea.sflag [#allocation3], %s203
        %s205 = sand.u32 %s43, 1
        %s206 = smul.addr %s205, 8
        %s207 = scalar_lea.vmem [#allocation2], %s206
        // Predicated region
        $region37: #{tpu_custom_call.1} parent=35 // pred_check
          %p208 = pneg %p56
        $region38: #{tpu_custom_call.1} parent=35 // pred_check_branch
          %210 = sbr.rel (%p208) target = $region40
        $region39: #{tpu_custom_call.1} parent=35 // pred_region
          %211 = dma.done %s204, 128
        $region40: #{tpu_custom_call.1} parent=35 // pred_fallthru
          _
        %s212 = sand.u32 %s43, 1
        %s213 = scalar_lea.sflag [#allocation3], %s212
        %s214 = sand.u32 %s43, 1
        %s215 = smul.addr %s214, 8
        %s216 = scalar_lea.vmem [#allocation2], %s215
        %p217 = pneg %p56
        %p218 = pneg %p53
        %p219 = pneg %p77
        %p220 = pneg %p74
        %p221 = pneg %p98
        %p222 = pneg %p95
        %p223 = pneg %p119
        %p224 = pneg %p116
        %p225 = pneg %p147
        %p226 = pneg %p144
        %s227 = sand.u32 %s134, 1
        %s228 = scalar_lea.sflag [#allocation4], %s227
        %s229 = sand.u32 %s134, 1
        %s230 = smul.addr %s229, 8
        %s231 = scalar_lea.vmem [#allocation5], %s230
        %s232 = smul.u32 2, %s26
        %s233 = smul.u32 2, %s26
        %v235 = vld [vmem:[%s207] sm:$0xff]
        %v237 = vcombine.high %v235, %v235
        %vm239 = vcmask 1043456
        %v240 = vsel %vm239, %v235, 0.0
        %v241 = vrot.slane %v240, 4
        %v242 = vadd.f32 %v240, %v241
        %v243 = vrot.slane %v242, 2
        %v244 = vadd.f32 %v242, %v243
        %v245 = vrot.slane %v244, 1
        %v246 = vadd.f32 %v244, %v245
        %v247 = vsel %vm239, %v237, 0.0
        %v248 = vrot.slane %v247, 4
        %v249 = vadd.f32 %v247, %v248
        %v250 = vrot.slane %v249, 2
        %v251 = vadd.f32 %v249, %v250
        %v252 = vrot.slane %v251, 1
        %v253 = vadd.f32 %v251, %v252
        %v254 = vrcp.pop 4.0
        %v255 = vmul.f32 %v246, %v254
        %v256 = vmul.f32 %v253, %v254
        %v257 = vmul.f32 %v235, %v235
        %v259 = vcombine.high %v257, %v257
        %v261 = vsel %vm239, %v257, 0.0
        %v262 = vrot.slane %v261, 4
        %v263 = vadd.f32 %v261, %v262
        %v264 = vrot.slane %v263, 2
        %v265 = vadd.f32 %v263, %v264
        %v266 = vrot.slane %v265, 1
        %v267 = vadd.f32 %v265, %v266
        %v268 = vsel %vm239, %v259, 0.0
        %v269 = vrot.slane %v268, 4
        %v270 = vadd.f32 %v268, %v269
        %v271 = vrot.slane %v270, 2
        %v272 = vadd.f32 %v270, %v271
        %v273 = vrot.slane %v272, 1
        %v274 = vadd.f32 %v272, %v273
        %v275 = vmul.f32 %v267, %v254
        %v276 = vmul.f32 %v274, %v254
        %v277 = vmul.f32 %v255, %v255
        %v278 = vmul.f32 %v256, %v256
        %v279 = vsub.f32 %v275, %v277
        %v280 = vsub.f32 %v276, %v278
        %v281 = vmax.f32 %v279, 0.0
        %v282 = vmax.f32 %v280, 0.0
        %v285 = vcombine.low %v255, %v256
        %v287 = vsub.f32 %v235, %v285
        %v288 = vadd.f32 %v281, 1e-05
        %v289 = vadd.f32 %v282, 1e-05
        %v290 = vrsqrt.pop %v288
        %v291 = vrsqrt.pop %v289
        %v294 = vcombine.low %v290, %v291
        %v296 = vmul.f32 %v287, %v294
        %v297 = vld [vmem:[%s1] sm:$0xf]
        %299 = vset.pattern.permute.xlu0 0
        %300 = vperm.xlu0 %299, %v297
        %v301 = vpop.permute.xlu0 %300
        %v303 = vunpack.c.l.s4 839922192
        %v304 = vunpack.c.0.s8 %v303
        %v305 = vlaneseq
        %v306 = vshrl.u32 %v305, 7
        %v307 = vsub.s32 %v304, %v306
        %v308 = vrot.slane %v301, %v307
        %v310 = vmul.f32 %v296, %v308
        %v311 = vld [vmem:[%s2] sm:$0x3]
        %v313 = vcombine.high %v310, %v310
        %v315 = vpack.c.bf16 %v310, %v310
        %v316 = vpack.c.bf16 %v313, %v313
        %v317 = vld [vmem:[%s3] sm:$0xf]
        %319 = vset.pattern.permute.xlu0 0
        %320 = vperm.xlu0 %319, %v317
        %v321 = vpop.permute.xlu0 %320
        %vm323 = vcmask 31744
        %v325 = vsel %vm323, %v311, 0
        %vm327 = vcmask 1041408
        %v329 = vsel %vm327, %v315, 0
        %v332 = vsel %vm327, %v316, 0
        %334 = vmatprep.subr.bf16.mxu0 %v332
        %335 = vmatpush1.bf16.msra.mxu0 %v329
        %336 = vmatprep.subr.bf16.mxu0 0
        %337 = vmatpush1.bf16.msra.mxu0 0
        %338 = vmatprep.subr.bf16.mxu0 0
        %339 = vmatpush1.bf16.msra.mxu0 0
        %340 = vmatprep.subr.bf16.mxu0 0
        %341 = vmatpush1.bf16.msra.mxu0 0
        %342 = vmatprep.subr.bf16.mxu0 0
        %343 = vmatpush1.bf16.msra.mxu0 0
        %344 = vmatprep.subr.bf16.mxu0 0
        %345 = vmatpush1.bf16.msra.mxu0 0
        %346 = vmatprep.subr.bf16.mxu0 0
        %347 = vmatpush1.bf16.msra.mxu0 0
        %348 = vmatprep.subr.bf16.mxu0 0
        %349 = vmatpush1.bf16.msra.mxu0 0
        %350 = vmatprep.subr.bf16.mxu0 0
        %351 = vmatpush1.bf16.msra.mxu0 0
        %352 = vmatprep.subr.bf16.mxu0 0
        %353 = vmatpush1.bf16.msra.mxu0 0
        %354 = vmatprep.subr.bf16.mxu0 0
        %355 = vmatpush1.bf16.msra.mxu0 0
        %356 = vmatprep.subr.bf16.mxu0 0
        %357 = vmatpush1.bf16.msra.mxu0 0
        %358 = vmatprep.subr.bf16.mxu0 0
        %359 = vmatpush1.bf16.msra.mxu0 0
        %360 = vmatprep.subr.bf16.mxu0 0
        %361 = vmatpush1.bf16.msra.mxu0 0
        %362 = vmatprep.subr.bf16.mxu0 0
        %363 = vmatpush1.bf16.msra.mxu0 0
        %364 = vmatprep.subr.bf16.mxu0 0
        %365 = vmatpush1.bf16.msra.mxu0 0
        %366 = vmatprep.mubr.bf16.mxu0 0
        %367 = vmatmul.mubr.bf16.gmra.mrb[0].mxu0 %v325
        %v368 = vpop.f32.mrb[0].mxu0
        %v369 = vadd.f32 %v321, %v368
        %v370 = vpop.f32.mrb[0].mxu0
        %v371 = vadd.f32 %v321, %v370
        %v372 = vpop.f32.mrb[0].mxu0
        %v373 = vpop.f32.mrb[0].mxu0
        %374 = vdwg.mxu0
        %v377 = vcombine.low %v369, %v371
        %379 = vst [vmem:[%s231] sm:$0xff] %v377
        %s380 = sand.u32 %s134, 1
        %s381 = scalar_lea.sflag [#allocation4], %s380
        %s382 = sand.u32 %s134, 1
        %s383 = smul.addr %s382, 8
        %s384 = scalar_lea.vmem [#allocation5], %s383
        // Predicated region
        $region41: #{tpu_custom_call.1} parent=35 // pred_check
          %p385 = pneg %p144
        $region42: #{tpu_custom_call.1} parent=35 // pred_check_branch
          %387 = sbr.rel (%p385) target = $region44
        $region43: #{tpu_custom_call.1} parent=35 // pred_region
          %s388 = smul.u32 2, %s26
          %s390 = ssub.s32 128, 128
          %391 = vsyncadd %s381, %s390
          %s392 = smul.addr %s25, 2
          %s393 = sadd.s32 %s388, %s392
          %s394 = smul.addr %s393, 64
          %s395 = scalar_lea.hbm %s4, %s394
          %s397 = sshll.u32 %s384, 4
          %s398 = int_to_ptr.vmem [resolvable:$true] %s397
          %400 = dma.vmem_to_hbm [thread:$0]  %s398, 128, %s395, %s381
        $region44: #{tpu_custom_call.1} parent=35 // pred_fallthru
          _
      $region36: #{tpu_custom_call.1} parent=5 // pred_fallthru
        _
      %p401 = scmp.le.s32.totalorder 2, %s16
      // Predicated region
      $region45: #{tpu_custom_call.1} parent=5 // pred_check
        %p402 = pneg %p401
      $region46: #{tpu_custom_call.1} parent=5 // pred_check_branch
        %404 = sbr.rel (%p402) target = $region48
      $region47: #{tpu_custom_call.1} parent=5 // pred_region
        %s405 = ssub.s32 %s16, 2
        // Predicated region
        $region49: #{tpu_custom_call.1} parent=47 // pred_check
          %p406 = pneg %p150
        $region50: #{tpu_custom_call.1} parent=47 // pred_check_branch
          %408 = sbr.rel (%p406) target = $region52
        $region51: #{tpu_custom_call.1} parent=47 // pred_region
          %s409 = sand.u32 %s135, 1
          %s410 = scalar_lea.sflag [#allocation4], %s409
          %s411 = sand.u32 %s135, 1
          %s412 = smul.addr %s411, 8
          %s413 = scalar_lea.vmem [#allocation5], %s412
          %414 = dma.done %s410, 128
        $region52: #{tpu_custom_call.1} parent=47 // pred_fallthru
          _
      $region48: #{tpu_custom_call.1} parent=5 // pred_fallthru
        _
    $region6: #{tpu_custom_call.1} parent=1 // loop_footer
      %s20 = sadd.s32 1, %s16
    $region7: #{tpu_custom_call.1} parent=1 // loop_footer_branch
      %15 = sbr.rel target = $region3
    $region8: #{tpu_custom_call.1} parent=1 // loop_exit
      _
    %415 = vsyncpa [#allocation3], 1
    %s416 = scalar_lea.sflag [#allocation3], 1
    %417 = vsyncpa %s416, 1
    %418 = vsyncpa [#allocation4], 1
    %s419 = scalar_lea.sflag [#allocation4], 1
    %420 = vsyncpa %s419, 1

</llo_original>
